<compile_context>
chip_gen: v7x
topology: tpu7x:2x2x1
jax: 0.10.0
libtpu: 0.0.40
codegen_flags: <defaults>
</compile_context>

<pallas_src>
import functools

import jax
import jax.numpy as jnp
from jax import lax
from jax.experimental import pallas as pl
from jax.experimental.pallas import tpu as pltpu


def _im2col_patch(img, mask, ones_row, img_w):
    """Register-resident im2col (+ bias row) of `img` (C, L) -> (9*C + 1, L).

    Row block tap*C:(tap+1)*C holds `img` shifted by (dy-1, dx-1) on the flattened lane
    axis (tap = dy*3 + dx), with out-of-image (padding) positions zeroed via the
    precomputed per-tap border mask.  The final row is all-ones so the bias can ride
    along as an extra weight column in the MXU matmul.

    Invariant: a spatial (dy, dx) shift is a constant shift of the flattened index, and
    every wrapped index (image-row wrap, batch seam, array end) is a position the border
    mask zeroes.  True only for 3x3 kernels with stride 1, dilation 1, padding 1.
    """
    c, L = img.shape
    pieces = []
    for tap in range(9):
        dy, dx = divmod(tap, 3)
        s = (dy - 1) * img_w + (dx - 1)              # flattened-index shift for this tap
        # want piece[f] = img[(f + s) mod L]  ==  roll by -s (jnp.roll convention)
        p = img if s == 0 else pltpu.roll(img, shift=(-s) % L, axis=1)
        pieces.append(jnp.where(mask[tap:tap + 1, :] != 0.0, p, 0.0))
    pieces.append(ones_row)
    return jnp.concatenate(pieces, axis=0)           # (9*c + 1, L), stays in vregs


def _endblock_kernel(x_ref, w1_ref, w2_ref, m_ref, o_ref, *, img_w):
    # x_ref : (Cin, L)            batch-fused flattened input (L = N*H*W, multiple of 128)
    # w1_ref: (Cout, 9*Cin + 1)   conv1 weights, column order (dy, dx, cin), bias last col
    # w2_ref: (Cout, 9*Cout + 1)  conv2 weights (+ bias column)
    # m_ref : (9, L)              per-tap validity masks (f32 0/1), tiled over the batch
    # o_ref : (Cout, L)           lane-dense output slab
    x = x_ref[...]
    m = m_ref[...]                                   # hoisted: one mask load per kernel
    ones_row = jnp.ones((1, x.shape[1]), jnp.float32)

    # ---- conv1: one MXU matmul (bias folded in) + ReLU ----
    p1 = _im2col_patch(x, m, ones_row, img_w)
    y1 = jnp.maximum(
        jnp.dot(w1_ref[...], p1, preferred_element_type=jnp.float32), 0.0)

    # ---- conv2: one MXU matmul (bias folded in) + Sigmoid ----
    p2 = _im2col_patch(y1, m, ones_row, img_w)
    y2 = jnp.dot(w2_ref[...], p2, preferred_element_type=jnp.float32)
    o_ref[...] = jax.nn.sigmoid(y2).astype(o_ref.dtype)


@jax.jit
def endblock_pallas(x_nchw, w1, b1, w2, b2):
    """x_nchw: (N, Cin, H, W). Weights HWIO: w1 (3,3,Cin,Cout), w2 (3,3,Cout,Cout)."""
    N, Cin, H, W = x_nchw.shape
    Cout = w1.shape[-1]
    HW = H * W
    L = N * HW

    # Batch fused onto the lane axis: (Cin, N*H*W), batch-major flattening.
    x_fused = jnp.transpose(x_nchw, (1, 0, 2, 3)).reshape(Cin, L).astype(jnp.float32)

    # Weights -> (Cout, 9*Cin), column order (dy, dx, cin); bias folded as the last column.
    w1_2d = jnp.transpose(w1, (3, 0, 1, 2)).reshape(Cout, 9 * Cin).astype(jnp.float32)
    w2_2d = jnp.transpose(w2, (3, 0, 1, 2)).reshape(Cout, 9 * Cout).astype(jnp.float32)
    w1_aug = jnp.concatenate([w1_2d, b1.reshape(Cout, 1).astype(jnp.float32)], axis=1)
    w2_aug = jnp.concatenate([w2_2d, b2.reshape(Cout, 1).astype(jnp.float32)], axis=1)

    # Per-tap validity masks over the flattened H*W grid (implements pad=1), tiled per batch.
    hh = jnp.arange(H)[:, None]
    ww = jnp.arange(W)[None, :]
    masks = []
    for dy in range(3):
        for dx in range(3):
            oy, ox = dy - 1, dx - 1
            valid = (hh + oy >= 0) & (hh + oy < H) & (ww + ox >= 0) & (ww + ox < W)
            masks.append(valid.reshape(HW))
    mask_arr = jnp.tile(jnp.stack(masks, axis=0).astype(jnp.float32), (1, N))  # (9, L)

    kernel = functools.partial(_endblock_kernel, img_w=W)

    out = pl.pallas_call(
        kernel,
        out_shape=jax.ShapeDtypeStruct((Cout, L), jnp.float32),
        grid_spec=pltpu.PrefetchScalarGridSpec(
            num_scalar_prefetch=0,
            grid=(1,),                               # single fused step; no scratch needed
            in_specs=[
                pl.BlockSpec((Cin, L), lambda n: (0, 0)),
                pl.BlockSpec((Cout, 9 * Cin + 1), lambda n: (0, 0)),
                pl.BlockSpec((Cout, 9 * Cout + 1), lambda n: (0, 0)),
                pl.BlockSpec((9, L), lambda n: (0, 0)),
            ],
            out_specs=pl.BlockSpec((Cout, L), lambda n: (0, 0)),
        ),
        compiler_params=pltpu.CompilerParams(
            dimension_semantics=("arbitrary",),
        ),
    )(x_fused, w1_aug, w2_aug, mask_arr)

    # (Cout, N*H*W) -> PyTorch NCHW
    return jnp.transpose(out.reshape(Cout, N, H, W), (1, 0, 2, 3))


def _reference(x_nchw, w1, b1, w2, b2):
    """Pure-JAX reference (same math as PyTorch EndBlock.forward)."""
    x = jnp.transpose(x_nchw, (0, 2, 3, 1)).astype(jnp.float32)  # NHWC
    dn = lax.conv_dimension_numbers(x.shape, w1.shape, ("NHWC", "HWIO", "NHWC"))
    y = lax.conv_general_dilated(x, w1, (1, 1), ((1, 1), (1, 1)),
                                 dimension_numbers=dn) + b1
    y = jnp.maximum(y, 0.0)
    dn2 = lax.conv_dimension_numbers(y.shape, w2.shape, ("NHWC", "HWIO", "NHWC"))
    z = lax.conv_general_dilated(y, w2, (1, 1), ((1, 1), (1, 1)),
                                 dimension_numbers=dn2) + b2
    z = jax.nn.sigmoid(z)
    return jnp.transpose(z, (0, 3, 1, 2))


if __name__ == "__main__":
    # Small shapes consistent with the module: N=2, inChannels=4, outChannels=4, 16x16 spatial.
    N, Cin, Cout, H, W = 2, 4, 4, 16, 16

    key = jax.random.PRNGKey(0)
    kx, k1, kb1, k2, kb2 = jax.random.split(key, 5)

    x = jax.random.normal(kx, (N, Cin, H, W), dtype=jnp.float32)
    # Deterministic synthetic parameters (HWIO layout), scaled like kaiming-ish init.
    w1 = jax.random.normal(k1, (3, 3, Cin, Cout), dtype=jnp.float32) * 0.2
    b1 = jax.random.normal(kb1, (Cout,), dtype=jnp.float32) * 0.05
    w2 = jax.random.normal(k2, (3, 3, Cout, Cout), dtype=jnp.float32) * 0.2
    b2 = jax.random.normal(kb2, (Cout,), dtype=jnp.float32) * 0.05

    out = endblock_pallas(x, w1, b1, w2, b2)
    out = jax.block_until_ready(out)

    ref = _reference(x, w1, b1, w2, b2)
    assert out.shape == (N, Cout, H, W), out.shape
    assert jnp.allclose(out, ref, atol=1e-5, rtol=1e-5), float(jnp.max(jnp.abs(out - ref)))

    print("KERNEL_OK")
</pallas_src>

<mosaic_0001>
module attributes {stable_mosaic.version = 11 : i64} {
  func.func @_endblock_kernel(%arg0: i32, %arg1: memref<4x512xf32, #tpu.memory_space<vmem>>, %arg2: memref<4x37xf32, #tpu.memory_space<vmem>>, %arg3: memref<4x37xf32, #tpu.memory_space<vmem>>, %arg4: memref<9x512xf32, #tpu.memory_space<vmem>>, %arg5: memref<4x512xf32, #tpu.memory_space<vmem>>) attributes {dimension_semantics = [#tpu.dimension_semantics<arbitrary>], iteration_bounds = array<i64: 1>, scalar_prefetch = 0 : i64, scratch_operands = 0 : i64, tpu.core_type = #tpu.core_type<tc>, window_params = [{pipeline_mode = #tpu.pipeline_mode<synchronous>, transform_indices = @transform_0, window_bounds = array<i64: 4, 512>}, {pipeline_mode = #tpu.pipeline_mode<synchronous>, transform_indices = @transform_1, window_bounds = array<i64: 4, 37>}, {pipeline_mode = #tpu.pipeline_mode<synchronous>, transform_indices = @transform_2, window_bounds = array<i64: 4, 37>}, {pipeline_mode = #tpu.pipeline_mode<synchronous>, transform_indices = @transform_3, window_bounds = array<i64: 9, 512>}, {pipeline_mode = #tpu.pipeline_mode<synchronous>, transform_indices = @transform_4, window_bounds = array<i64: 4, 512>}]} {
    %c0 = arith.constant 0 : index
    %c0_0 = arith.constant 0 : index
    %0 = vector.load %arg1[%c0, %c0_0] : memref<4x512xf32, #tpu.memory_space<vmem>>, vector<4x512xf32>
    %c0_1 = arith.constant 0 : index
    %c0_2 = arith.constant 0 : index
    %1 = vector.load %arg4[%c0_1, %c0_2] : memref<9x512xf32, #tpu.memory_space<vmem>>, vector<9x512xf32>
    %cst = arith.constant 1.000000e+00 : f32
    %2 = vector.broadcast %cst : f32 to vector<1x512xf32>
    %c17_i32 = arith.constant 17 : i32
    %3 = tpu.dynamic_rotate %0 by %c17_i32 dim 1 : vector<4x512xf32>, i32 -> vector<4x512xf32>
    %4 = vector.extract_strided_slice %1 {offsets = [0, 0], sizes = [1, 512], strides = [1, 1]} : vector<9x512xf32> to vector<1x512xf32>
    %cst_3 = arith.constant 0.000000e+00 : f32
    %5 = vector.broadcast %cst_3 : f32 to vector<1x512xf32>
    %6 = arith.cmpf one, %4, %5 : vector<1x512xf32>
    %cst_4 = arith.constant 0.000000e+00 : f32
    %7 = vector.shape_cast %6 : vector<1x512xi1> to vector<1x512xi1>
    %8 = vector.broadcast %7 : vector<1x512xi1> to vector<4x512xi1>
    %9 = vector.broadcast %cst_4 : f32 to vector<4x512xf32>
    %10 = arith.select %8, %3, %9 : vector<4x512xi1>, vector<4x512xf32>
    %c16_i32 = arith.constant 16 : i32
    %11 = tpu.dynamic_rotate %0 by %c16_i32 dim 1 : vector<4x512xf32>, i32 -> vector<4x512xf32>
    %12 = vector.extract_strided_slice %1 {offsets = [1, 0], sizes = [1, 512], strides = [1, 1]} : vector<9x512xf32> to vector<1x512xf32>
    %cst_5 = arith.constant 0.000000e+00 : f32
    %13 = vector.broadcast %cst_5 : f32 to vector<1x512xf32>
    %14 = arith.cmpf one, %12, %13 : vector<1x512xf32>
    %cst_6 = arith.constant 0.000000e+00 : f32
    %15 = vector.shape_cast %14 : vector<1x512xi1> to vector<1x512xi1>
    %16 = vector.broadcast %15 : vector<1x512xi1> to vector<4x512xi1>
    %17 = vector.broadcast %cst_6 : f32 to vector<4x512xf32>
    %18 = arith.select %16, %11, %17 : vector<4x512xi1>, vector<4x512xf32>
    %c15_i32 = arith.constant 15 : i32
    %19 = tpu.dynamic_rotate %0 by %c15_i32 dim 1 : vector<4x512xf32>, i32 -> vector<4x512xf32>
    %20 = vector.extract_strided_slice %1 {offsets = [2, 0], sizes = [1, 512], strides = [1, 1]} : vector<9x512xf32> to vector<1x512xf32>
    %cst_7 = arith.constant 0.000000e+00 : f32
    %21 = vector.broadcast %cst_7 : f32 to vector<1x512xf32>
    %22 = arith.cmpf one, %20, %21 : vector<1x512xf32>
    %cst_8 = arith.constant 0.000000e+00 : f32
    %23 = vector.shape_cast %22 : vector<1x512xi1> to vector<1x512xi1>
    %24 = vector.broadcast %23 : vector<1x512xi1> to vector<4x512xi1>
    %25 = vector.broadcast %cst_8 : f32 to vector<4x512xf32>
    %26 = arith.select %24, %19, %25 : vector<4x512xi1>, vector<4x512xf32>
    %c1_i32 = arith.constant 1 : i32
    %27 = tpu.dynamic_rotate %0 by %c1_i32 dim 1 : vector<4x512xf32>, i32 -> vector<4x512xf32>
    %28 = vector.extract_strided_slice %1 {offsets = [3, 0], sizes = [1, 512], strides = [1, 1]} : vector<9x512xf32> to vector<1x512xf32>
    %cst_9 = arith.constant 0.000000e+00 : f32
    %29 = vector.broadcast %cst_9 : f32 to vector<1x512xf32>
    %30 = arith.cmpf one, %28, %29 : vector<1x512xf32>
    %cst_10 = arith.constant 0.000000e+00 : f32
    %31 = vector.shape_cast %30 : vector<1x512xi1> to vector<1x512xi1>
    %32 = vector.broadcast %31 : vector<1x512xi1> to vector<4x512xi1>
    %33 = vector.broadcast %cst_10 : f32 to vector<4x512xf32>
    %34 = arith.select %32, %27, %33 : vector<4x512xi1>, vector<4x512xf32>
    %35 = vector.extract_strided_slice %1 {offsets = [4, 0], sizes = [1, 512], strides = [1, 1]} : vector<9x512xf32> to vector<1x512xf32>
    %cst_11 = arith.constant 0.000000e+00 : f32
    %36 = vector.broadcast %cst_11 : f32 to vector<1x512xf32>
    %37 = arith.cmpf one, %35, %36 : vector<1x512xf32>
    %cst_12 = arith.constant 0.000000e+00 : f32
    %38 = vector.shape_cast %37 : vector<1x512xi1> to vector<1x512xi1>
    %39 = vector.broadcast %38 : vector<1x512xi1> to vector<4x512xi1>
    %40 = vector.broadcast %cst_12 : f32 to vector<4x512xf32>
    %41 = arith.select %39, %0, %40 : vector<4x512xi1>, vector<4x512xf32>
    %c511_i32 = arith.constant 511 : i32
    %42 = tpu.dynamic_rotate %0 by %c511_i32 dim 1 : vector<4x512xf32>, i32 -> vector<4x512xf32>
    %43 = vector.extract_strided_slice %1 {offsets = [5, 0], sizes = [1, 512], strides = [1, 1]} : vector<9x512xf32> to vector<1x512xf32>
    %cst_13 = arith.constant 0.000000e+00 : f32
    %44 = vector.broadcast %cst_13 : f32 to vector<1x512xf32>
    %45 = arith.cmpf one, %43, %44 : vector<1x512xf32>
    %cst_14 = arith.constant 0.000000e+00 : f32
    %46 = vector.shape_cast %45 : vector<1x512xi1> to vector<1x512xi1>
    %47 = vector.broadcast %46 : vector<1x512xi1> to vector<4x512xi1>
    %48 = vector.broadcast %cst_14 : f32 to vector<4x512xf32>
    %49 = arith.select %47, %42, %48 : vector<4x512xi1>, vector<4x512xf32>
    %c497_i32 = arith.constant 497 : i32
    %50 = tpu.dynamic_rotate %0 by %c497_i32 dim 1 : vector<4x512xf32>, i32 -> vector<4x512xf32>
    %51 = vector.extract_strided_slice %1 {offsets = [6, 0], sizes = [1, 512], strides = [1, 1]} : vector<9x512xf32> to vector<1x512xf32>
    %cst_15 = arith.constant 0.000000e+00 : f32
    %52 = vector.broadcast %cst_15 : f32 to vector<1x512xf32>
    %53 = arith.cmpf one, %51, %52 : vector<1x512xf32>
    %cst_16 = arith.constant 0.000000e+00 : f32
    %54 = vector.shape_cast %53 : vector<1x512xi1> to vector<1x512xi1>
    %55 = vector.broadcast %54 : vector<1x512xi1> to vector<4x512xi1>
    %56 = vector.broadcast %cst_16 : f32 to vector<4x512xf32>
    %57 = arith.select %55, %50, %56 : vector<4x512xi1>, vector<4x512xf32>
    %c496_i32 = arith.constant 496 : i32
    %58 = tpu.dynamic_rotate %0 by %c496_i32 dim 1 : vector<4x512xf32>, i32 -> vector<4x512xf32>
    %59 = vector.extract_strided_slice %1 {offsets = [7, 0], sizes = [1, 512], strides = [1, 1]} : vector<9x512xf32> to vector<1x512xf32>
    %cst_17 = arith.constant 0.000000e+00 : f32
    %60 = vector.broadcast %cst_17 : f32 to vector<1x512xf32>
    %61 = arith.cmpf one, %59, %60 : vector<1x512xf32>
    %cst_18 = arith.constant 0.000000e+00 : f32
    %62 = vector.shape_cast %61 : vector<1x512xi1> to vector<1x512xi1>
    %63 = vector.broadcast %62 : vector<1x512xi1> to vector<4x512xi1>
    %64 = vector.broadcast %cst_18 : f32 to vector<4x512xf32>
    %65 = arith.select %63, %58, %64 : vector<4x512xi1>, vector<4x512xf32>
    %c495_i32 = arith.constant 495 : i32
    %66 = tpu.dynamic_rotate %0 by %c495_i32 dim 1 : vector<4x512xf32>, i32 -> vector<4x512xf32>
    %67 = vector.extract_strided_slice %1 {offsets = [8, 0], sizes = [1, 512], strides = [1, 1]} : vector<9x512xf32> to vector<1x512xf32>
    %cst_19 = arith.constant 0.000000e+00 : f32
    %68 = vector.broadcast %cst_19 : f32 to vector<1x512xf32>
    %69 = arith.cmpf one, %67, %68 : vector<1x512xf32>
    %cst_20 = arith.constant 0.000000e+00 : f32
    %70 = vector.shape_cast %69 : vector<1x512xi1> to vector<1x512xi1>
    %71 = vector.broadcast %70 : vector<1x512xi1> to vector<4x512xi1>
    %72 = vector.broadcast %cst_20 : f32 to vector<4x512xf32>
    %73 = arith.select %71, %66, %72 : vector<4x512xi1>, vector<4x512xf32>
    %74 = tpu.concatenate %10, %18, %26, %34, %41, %49, %57, %65, %73, %2 in 0 : vector<4x512xf32>, vector<4x512xf32>, vector<4x512xf32>, vector<4x512xf32>, vector<4x512xf32>, vector<4x512xf32>, vector<4x512xf32>, vector<4x512xf32>, vector<4x512xf32>, vector<1x512xf32> -> vector<37x512xf32>
    %c0_21 = arith.constant 0 : index
    %c0_22 = arith.constant 0 : index
    %75 = vector.load %arg2[%c0_21, %c0_22] : memref<4x37xf32, #tpu.memory_space<vmem>>, vector<4x37xf32>
    %cst_23 = arith.constant dense<0.000000e+00> : vector<4x512xf32>
    %76 = tpu.matmul %75, %74, %cst_23 {dimension_numbers = #tpu.dot_dimension_numbers<[1], [0], [0], [1], [0, 0, 1, 1], [], []>} : vector<4x37xf32>, vector<37x512xf32>, vector<4x512xf32> -> vector<4x512xf32>
    %cst_24 = arith.constant 0.000000e+00 : f32
    %77 = vector.broadcast %cst_24 : f32 to vector<4x512xf32>
    %78 = arith.maximumf %76, %77 : vector<4x512xf32>
    %c17_i32_25 = arith.constant 17 : i32
    %79 = tpu.dynamic_rotate %78 by %c17_i32_25 dim 1 : vector<4x512xf32>, i32 -> vector<4x512xf32>
    %80 = vector.extract_strided_slice %1 {offsets = [0, 0], sizes = [1, 512], strides = [1, 1]} : vector<9x512xf32> to vector<1x512xf32>
    %cst_26 = arith.constant 0.000000e+00 : f32
    %81 = vector.broadcast %cst_26 : f32 to vector<1x512xf32>
    %82 = arith.cmpf one, %80, %81 : vector<1x512xf32>
    %cst_27 = arith.constant 0.000000e+00 : f32
    %83 = vector.shape_cast %82 : vector<1x512xi1> to vector<1x512xi1>
    %84 = vector.broadcast %83 : vector<1x512xi1> to vector<4x512xi1>
    %85 = vector.broadcast %cst_27 : f32 to vector<4x512xf32>
    %86 = arith.select %84, %79, %85 : vector<4x512xi1>, vector<4x512xf32>
    %c16_i32_28 = arith.constant 16 : i32
    %87 = tpu.dynamic_rotate %78 by %c16_i32_28 dim 1 : vector<4x512xf32>, i32 -> vector<4x512xf32>
    %88 = vector.extract_strided_slice %1 {offsets = [1, 0], sizes = [1, 512], strides = [1, 1]} : vector<9x512xf32> to vector<1x512xf32>
    %cst_29 = arith.constant 0.000000e+00 : f32
    %89 = vector.broadcast %cst_29 : f32 to vector<1x512xf32>
    %90 = arith.cmpf one, %88, %89 : vector<1x512xf32>
    %cst_30 = arith.constant 0.000000e+00 : f32
    %91 = vector.shape_cast %90 : vector<1x512xi1> to vector<1x512xi1>
    %92 = vector.broadcast %91 : vector<1x512xi1> to vector<4x512xi1>
    %93 = vector.broadcast %cst_30 : f32 to vector<4x512xf32>
    %94 = arith.select %92, %87, %93 : vector<4x512xi1>, vector<4x512xf32>
    %c15_i32_31 = arith.constant 15 : i32
    %95 = tpu.dynamic_rotate %78 by %c15_i32_31 dim 1 : vector<4x512xf32>, i32 -> vector<4x512xf32>
    %96 = vector.extract_strided_slice %1 {offsets = [2, 0], sizes = [1, 512], strides = [1, 1]} : vector<9x512xf32> to vector<1x512xf32>
    %cst_32 = arith.constant 0.000000e+00 : f32
    %97 = vector.broadcast %cst_32 : f32 to vector<1x512xf32>
    %98 = arith.cmpf one, %96, %97 : vector<1x512xf32>
    %cst_33 = arith.constant 0.000000e+00 : f32
    %99 = vector.shape_cast %98 : vector<1x512xi1> to vector<1x512xi1>
    %100 = vector.broadcast %99 : vector<1x512xi1> to vector<4x512xi1>
    %101 = vector.broadcast %cst_33 : f32 to vector<4x512xf32>
    %102 = arith.select %100, %95, %101 : vector<4x512xi1>, vector<4x512xf32>
    %c1_i32_34 = arith.constant 1 : i32
    %103 = tpu.dynamic_rotate %78 by %c1_i32_34 dim 1 : vector<4x512xf32>, i32 -> vector<4x512xf32>
    %104 = vector.extract_strided_slice %1 {offsets = [3, 0], sizes = [1, 512], strides = [1, 1]} : vector<9x512xf32> to vector<1x512xf32>
    %cst_35 = arith.constant 0.000000e+00 : f32
    %105 = vector.broadcast %cst_35 : f32 to vector<1x512xf32>
    %106 = arith.cmpf one, %104, %105 : vector<1x512xf32>
    %cst_36 = arith.constant 0.000000e+00 : f32
    %107 = vector.shape_cast %106 : vector<1x512xi1> to vector<1x512xi1>
    %108 = vector.broadcast %107 : vector<1x512xi1> to vector<4x512xi1>
    %109 = vector.broadcast %cst_36 : f32 to vector<4x512xf32>
    %110 = arith.select %108, %103, %109 : vector<4x512xi1>, vector<4x512xf32>
    %111 = vector.extract_strided_slice %1 {offsets = [4, 0], sizes = [1, 512], strides = [1, 1]} : vector<9x512xf32> to vector<1x512xf32>
    %cst_37 = arith.constant 0.000000e+00 : f32
    %112 = vector.broadcast %cst_37 : f32 to vector<1x512xf32>
    %113 = arith.cmpf one, %111, %112 : vector<1x512xf32>
    %cst_38 = arith.constant 0.000000e+00 : f32
    %114 = vector.shape_cast %113 : vector<1x512xi1> to vector<1x512xi1>
    %115 = vector.broadcast %114 : vector<1x512xi1> to vector<4x512xi1>
    %116 = vector.broadcast %cst_38 : f32 to vector<4x512xf32>
    %117 = arith.select %115, %78, %116 : vector<4x512xi1>, vector<4x512xf32>
    %c511_i32_39 = arith.constant 511 : i32
    %118 = tpu.dynamic_rotate %78 by %c511_i32_39 dim 1 : vector<4x512xf32>, i32 -> vector<4x512xf32>
    %119 = vector.extract_strided_slice %1 {offsets = [5, 0], sizes = [1, 512], strides = [1, 1]} : vector<9x512xf32> to vector<1x512xf32>
    %cst_40 = arith.constant 0.000000e+00 : f32
    %120 = vector.broadcast %cst_40 : f32 to vector<1x512xf32>
    %121 = arith.cmpf one, %119, %120 : vector<1x512xf32>
    %cst_41 = arith.constant 0.000000e+00 : f32
    %122 = vector.shape_cast %121 : vector<1x512xi1> to vector<1x512xi1>
    %123 = vector.broadcast %122 : vector<1x512xi1> to vector<4x512xi1>
    %124 = vector.broadcast %cst_41 : f32 to vector<4x512xf32>
    %125 = arith.select %123, %118, %124 : vector<4x512xi1>, vector<4x512xf32>
    %c497_i32_42 = arith.constant 497 : i32
    %126 = tpu.dynamic_rotate %78 by %c497_i32_42 dim 1 : vector<4x512xf32>, i32 -> vector<4x512xf32>
    %127 = vector.extract_strided_slice %1 {offsets = [6, 0], sizes = [1, 512], strides = [1, 1]} : vector<9x512xf32> to vector<1x512xf32>
    %cst_43 = arith.constant 0.000000e+00 : f32
    %128 = vector.broadcast %cst_43 : f32 to vector<1x512xf32>
    %129 = arith.cmpf one, %127, %128 : vector<1x512xf32>
    %cst_44 = arith.constant 0.000000e+00 : f32
    %130 = vector.shape_cast %129 : vector<1x512xi1> to vector<1x512xi1>
    %131 = vector.broadcast %130 : vector<1x512xi1> to vector<4x512xi1>
    %132 = vector.broadcast %cst_44 : f32 to vector<4x512xf32>
    %133 = arith.select %131, %126, %132 : vector<4x512xi1>, vector<4x512xf32>
    %c496_i32_45 = arith.constant 496 : i32
    %134 = tpu.dynamic_rotate %78 by %c496_i32_45 dim 1 : vector<4x512xf32>, i32 -> vector<4x512xf32>
    %135 = vector.extract_strided_slice %1 {offsets = [7, 0], sizes = [1, 512], strides = [1, 1]} : vector<9x512xf32> to vector<1x512xf32>
    %cst_46 = arith.constant 0.000000e+00 : f32
    %136 = vector.broadcast %cst_46 : f32 to vector<1x512xf32>
    %137 = arith.cmpf one, %135, %136 : vector<1x512xf32>
    %cst_47 = arith.constant 0.000000e+00 : f32
    %138 = vector.shape_cast %137 : vector<1x512xi1> to vector<1x512xi1>
    %139 = vector.broadcast %138 : vector<1x512xi1> to vector<4x512xi1>
    %140 = vector.broadcast %cst_47 : f32 to vector<4x512xf32>
    %141 = arith.select %139, %134, %140 : vector<4x512xi1>, vector<4x512xf32>
    %c495_i32_48 = arith.constant 495 : i32
    %142 = tpu.dynamic_rotate %78 by %c495_i32_48 dim 1 : vector<4x512xf32>, i32 -> vector<4x512xf32>
    %143 = vector.extract_strided_slice %1 {offsets = [8, 0], sizes = [1, 512], strides = [1, 1]} : vector<9x512xf32> to vector<1x512xf32>
    %cst_49 = arith.constant 0.000000e+00 : f32
    %144 = vector.broadcast %cst_49 : f32 to vector<1x512xf32>
    %145 = arith.cmpf one, %143, %144 : vector<1x512xf32>
    %cst_50 = arith.constant 0.000000e+00 : f32
    %146 = vector.shape_cast %145 : vector<1x512xi1> to vector<1x512xi1>
    %147 = vector.broadcast %146 : vector<1x512xi1> to vector<4x512xi1>
    %148 = vector.broadcast %cst_50 : f32 to vector<4x512xf32>
    %149 = arith.select %147, %142, %148 : vector<4x512xi1>, vector<4x512xf32>
    %150 = tpu.concatenate %86, %94, %102, %110, %117, %125, %133, %141, %149, %2 in 0 : vector<4x512xf32>, vector<4x512xf32>, vector<4x512xf32>, vector<4x512xf32>, vector<4x512xf32>, vector<4x512xf32>, vector<4x512xf32>, vector<4x512xf32>, vector<4x512xf32>, vector<1x512xf32> -> vector<37x512xf32>
    %c0_51 = arith.constant 0 : index
    %c0_52 = arith.constant 0 : index
    %151 = vector.load %arg3[%c0_51, %c0_52] : memref<4x37xf32, #tpu.memory_space<vmem>>, vector<4x37xf32>
    %cst_53 = arith.constant dense<0.000000e+00> : vector<4x512xf32>
    %152 = tpu.matmul %151, %150, %cst_53 {dimension_numbers = #tpu.dot_dimension_numbers<[1], [0], [0], [1], [0, 0, 1, 1], [], []>} : vector<4x37xf32>, vector<37x512xf32>, vector<4x512xf32> -> vector<4x512xf32>
    %153 = arith.negf %152 : vector<4x512xf32>
    %154 = math.exp %153 : vector<4x512xf32>
    %cst_54 = arith.constant 1.000000e+00 : f32
    %155 = vector.broadcast %cst_54 : f32 to vector<4x512xf32>
    %156 = arith.addf %155, %154 : vector<4x512xf32>
    %157 = arith.divf %155, %156 : vector<4x512xf32>
    %c0_55 = arith.constant 0 : index
    %c0_56 = arith.constant 0 : index
    %158 = vector.load %arg5[%c0_55, %c0_56] : memref<4x512xf32, #tpu.memory_space<vmem>>, vector<4x512xf32>
    tpu.vector_store %arg5[%c0_55, %c0_56], %157 {strides = array<i32>} : memref<4x512xf32, #tpu.memory_space<vmem>>, vector<4x512xf32>,
    return
  }
  func.func @transform_0(%arg0: i32) -> (i32, i32) {
    %c0_i32 = arith.constant 0 : i32
    %c0_i32_0 = arith.constant 0 : i32
    %c0_i32_1 = arith.constant 0 : i32
    return %c0_i32, %c0_i32_0 : i32, i32
  }
  func.func @transform_1(%arg0: i32) -> (i32, i32) {
    %c0_i32 = arith.constant 0 : i32
    %c0_i32_0 = arith.constant 0 : i32
    %c0_i32_1 = arith.constant 0 : i32
    return %c0_i32, %c0_i32_0 : i32, i32
  }
  func.func @transform_2(%arg0: i32) -> (i32, i32) {
    %c0_i32 = arith.constant 0 : i32
    %c0_i32_0 = arith.constant 0 : i32
    %c0_i32_1 = arith.constant 0 : i32
    return %c0_i32, %c0_i32_0 : i32, i32
  }
  func.func @transform_3(%arg0: i32) -> (i32, i32) {
    %c0_i32 = arith.constant 0 : i32
    %c0_i32_0 = arith.constant 0 : i32
    %c0_i32_1 = arith.constant 0 : i32
    return %c0_i32, %c0_i32_0 : i32, i32
  }
  func.func @transform_4(%arg0: i32) -> (i32, i32) {
    %c0_i32 = arith.constant 0 : i32
    %c0_i32_0 = arith.constant 0 : i32
    %c0_i32_1 = arith.constant 0 : i32
    return %c0_i32, %c0_i32_0 : i32, i32
  }
}

</mosaic_0001>

<llo_original>
// kernel: endblock_pallas.1
$region0: #{endblock_pallas.1}
  #allocation0 [shape = 'u32[]', space=smem, size = 0x4, offset = 0x4, fixed_abs, tag = 'smem constant byte address 0x4 - core index']
  #allocation1 [shape = 'u32[144,128]{1,0:T(1,128)}', space=vmem, size = 0x12000, scoped, tag = 'internal scratch']
  %s0 = inlined_call_operand.vmem [shape: f32[4,512], index: 0, kind: input, shape index: {}]
  %s1 = inlined_call_operand.vmem [shape: f32[4,37], index: 1, kind: input, shape index: {}]
  %s2 = inlined_call_operand.vmem [shape: f32[4,37], index: 2, kind: input, shape index: {}]
  %s3 = inlined_call_operand.vmem [shape: f32[9,512], index: 3, kind: input, shape index: {}]
  %s4 = inlined_call_operand.vmem [shape: f32[4,512], index: 4, kind: output, shape index: {}]
  %s5 = sld [smem:[#allocation0]]
  $region26: #{endblock_pallas.1} parent=0
    _
  %s7 = ssub.s32 1, %s5
  %s8 = scalar_select 0, %s7, %s5
  // Predicated region
  $region2: #{endblock_pallas.1} parent=0 // pred_check
    _
  $region3: #{endblock_pallas.1} parent=0 // pred_check_branch
    %10 = sbr.rel (0) target = $region5
  $region4: #{endblock_pallas.1} parent=0 // pred_region
    _
  $region5: #{endblock_pallas.1} parent=0 // pred_fallthru
    _
  // Predicated region
  $region6: #{endblock_pallas.1} parent=0 // pred_check
    _
  $region7: #{endblock_pallas.1} parent=0 // pred_check_branch
    %12 = sbr.rel (0) target = $region9
  $region8: #{endblock_pallas.1} parent=0 // pred_region
    _
  $region9: #{endblock_pallas.1} parent=0 // pred_fallthru
    _
  // Predicated region
  $region10: #{endblock_pallas.1} parent=0 // pred_check
    _
  $region11: #{endblock_pallas.1} parent=0 // pred_check_branch
    %14 = sbr.rel (0) target = $region13
  $region12: #{endblock_pallas.1} parent=0 // pred_region
    _
  $region13: #{endblock_pallas.1} parent=0 // pred_fallthru
    _
  // Predicated region
  $region14: #{endblock_pallas.1} parent=0 // pred_check
    _
  $region15: #{endblock_pallas.1} parent=0 // pred_check_branch
    %16 = sbr.rel (0) target = $region17
  $region16: #{endblock_pallas.1} parent=0 // pred_region
    _
  $region17: #{endblock_pallas.1} parent=0 // pred_fallthru
    _
  %v17 = vld [vmem:[%s0] sm:$0xff]
  %v18 = vld [vmem:[%s0 + $0x8] sm:$0xff]
  %v19 = vld [vmem:[%s3] sm:$0xff]
  %v20 = vld [vmem:[%s3 + $0x8] sm:$0xff]
  %v21 = vld [vmem:[%s3 + $0x10] sm:$0xff]
  %v22 = vld [vmem:[%s3 + $0x18] sm:$0xff]
  %v23 = vld [vmem:[%s3 + $0x20] sm:$0x1]
  %v24 = vld [vmem:[%s3 + $0x28] sm:$0x1]
  %v25 = vld [vmem:[%s3 + $0x30] sm:$0x1]
  %v26 = vld [vmem:[%s3 + $0x38] sm:$0x1]
  %v29 = vcombine.high %v17, %v17
  %v30 = vcombine.high %v18, %v18
  %33 = vrot.lane.b32.xlu0 %v17, 17
  %v34 = vpop.permute.xlu0 %33
  %35 = vrot.lane.b32.xlu0 %v29, 17
  %v36 = vpop.permute.xlu0 %35
  %37 = vrot.lane.b32.xlu0 %v18, 17
  %v38 = vpop.permute.xlu0 %37
  %39 = vrot.lane.b32.xlu0 %v30, 17
  %v40 = vpop.permute.xlu0 %39
  %v41 = vlaneseq
  %v42 = vand.u32 %v41, 127
  %vm43 = vcmp.lt.s32.totalorder %v42, 17
  %v44 = vsel %vm43, %v38, %v40
  %v45 = vsel %vm43, %v36, %v38
  %v46 = vsel %vm43, %v34, %v36
  %v47 = vsel %vm43, %v40, %v34
  %vm48 = vcmp.ne.f32.partialorder %v19, 0.0
  %vm49 = vcmp.ne.f32.partialorder %v20, 0.0
  %vm50 = vcmp.ne.f32.partialorder %v21, 0.0
  %vm51 = vcmp.ne.f32.partialorder %v22, 0.0
  %v52 = vsel %vm48, 1, 0
  %v53 = vsel %vm49, 1, 0
  %v54 = vsel %vm50, 1, 0
  %v55 = vsel %vm51, 1, 0
  %v56 = vlaneseq
  %v57 = vshrl.u32 %v56, 7
  %v58 = vsub.s32 0, %v57
  %v59 = vrot.slane %v52, %v58
  %v60 = vlaneseq
  %v61 = vshrl.u32 %v60, 7
  %v62 = vsub.s32 0, %v61
  %v63 = vrot.slane %v53, %v62
  %v64 = vlaneseq
  %v65 = vshrl.u32 %v64, 7
  %v66 = vsub.s32 0, %v65
  %v67 = vrot.slane %v54, %v66
  %v68 = vlaneseq
  %v69 = vshrl.u32 %v68, 7
  %v70 = vsub.s32 0, %v69
  %v71 = vrot.slane %v55, %v70
  %vm72 = vcmp.eq.s32.totalorder %v59, 1
  %vm73 = vcmp.eq.s32.totalorder %v63, 1
  %vm74 = vcmp.eq.s32.totalorder %v67, 1
  %vm75 = vcmp.eq.s32.totalorder %v71, 1
  %v76 = vsel %vm72, %v47, 0.0
  %v77 = vsel %vm73, %v46, 0.0
  %v78 = vsel %vm74, %v45, 0.0
  %v79 = vsel %vm75, %v44, 0.0
  %80 = vrot.lane.b32.xlu0 %v17, 16
  %v81 = vpop.permute.xlu0 %80
  %82 = vrot.lane.b32.xlu0 %v29, 16
  %v83 = vpop.permute.xlu0 %82
  %84 = vrot.lane.b32.xlu0 %v18, 16
  %v85 = vpop.permute.xlu0 %84
  %86 = vrot.lane.b32.xlu0 %v30, 16
  %v87 = vpop.permute.xlu0 %86
  %vm88 = vcmp.lt.s32.totalorder %v42, 16
  %v89 = vsel %vm88, %v85, %v87
  %v90 = vsel %vm88, %v83, %v85
  %v91 = vsel %vm88, %v81, %v83
  %v92 = vsel %vm88, %v87, %v81
  %v93 = vlaneseq
  %v94 = vshrl.u32 %v93, 7
  %v95 = vsub.s32 1, %v94
  %v96 = vrot.slane %v52, %v95
  %v97 = vlaneseq
  %v98 = vshrl.u32 %v97, 7
  %v99 = vsub.s32 1, %v98
  %v100 = vrot.slane %v53, %v99
  %v101 = vlaneseq
  %v102 = vshrl.u32 %v101, 7
  %v103 = vsub.s32 1, %v102
  %v104 = vrot.slane %v54, %v103
  %v105 = vlaneseq
  %v106 = vshrl.u32 %v105, 7
  %v107 = vsub.s32 1, %v106
  %v108 = vrot.slane %v55, %v107
  %vm109 = vcmp.eq.s32.totalorder %v96, 1
  %vm110 = vcmp.eq.s32.totalorder %v100, 1
  %vm111 = vcmp.eq.s32.totalorder %v104, 1
  %vm112 = vcmp.eq.s32.totalorder %v108, 1
  %v113 = vsel %vm109, %v92, 0.0
  %v114 = vsel %vm110, %v91, 0.0
  %v115 = vsel %vm111, %v90, 0.0
  %v116 = vsel %vm112, %v89, 0.0
  %117 = vrot.lane.b32.xlu0 %v17, 15
  %v118 = vpop.permute.xlu0 %117
  %119 = vrot.lane.b32.xlu0 %v29, 15
  %v120 = vpop.permute.xlu0 %119
  %121 = vrot.lane.b32.xlu0 %v18, 15
  %v122 = vpop.permute.xlu0 %121
  %123 = vrot.lane.b32.xlu0 %v30, 15
  %v124 = vpop.permute.xlu0 %123
  %vm125 = vcmp.lt.s32.totalorder %v42, 15
  %v126 = vsel %vm125, %v122, %v124
  %v127 = vsel %vm125, %v120, %v122
  %v128 = vsel %vm125, %v118, %v120
  %v129 = vsel %vm125, %v124, %v118
  %v130 = vlaneseq
  %v131 = vshrl.u32 %v130, 7
  %v132 = vsub.s32 2, %v131
  %v133 = vrot.slane %v52, %v132
  %v134 = vlaneseq
  %v135 = vshrl.u32 %v134, 7
  %v136 = vsub.s32 2, %v135
  %v137 = vrot.slane %v53, %v136
  %v138 = vlaneseq
  %v139 = vshrl.u32 %v138, 7
  %v140 = vsub.s32 2, %v139
  %v141 = vrot.slane %v54, %v140
  %v142 = vlaneseq
  %v143 = vshrl.u32 %v142, 7
  %v144 = vsub.s32 2, %v143
  %v145 = vrot.slane %v55, %v144
  %vm146 = vcmp.eq.s32.totalorder %v133, 1
  %vm147 = vcmp.eq.s32.totalorder %v137, 1
  %vm148 = vcmp.eq.s32.totalorder %v141, 1
  %vm149 = vcmp.eq.s32.totalorder %v145, 1
  %v150 = vsel %vm146, %v129, 0.0
  %v151 = vsel %vm147, %v128, 0.0
  %v152 = vsel %vm148, %v127, 0.0
  %v153 = vsel %vm149, %v126, 0.0
  %154 = vrot.lane.b32.xlu0 %v17, 1
  %v155 = vpop.permute.xlu0 %154
  %156 = vrot.lane.b32.xlu0 %v29, 1
  %v157 = vpop.permute.xlu0 %156
  %158 = vrot.lane.b32.xlu0 %v18, 1
  %v159 = vpop.permute.xlu0 %158
  %160 = vrot.lane.b32.xlu0 %v30, 1
  %v161 = vpop.permute.xlu0 %160
  %vm162 = vcmp.lt.s32.totalorder %v42, 1
  %v163 = vsel %vm162, %v159, %v161
  %v164 = vsel %vm162, %v157, %v159
  %v165 = vsel %vm162, %v155, %v157
  %v166 = vsel %vm162, %v161, %v155
  %v167 = vlaneseq
  %v168 = vshrl.u32 %v167, 7
  %v169 = vsub.s32 3, %v168
  %v170 = vrot.slane %v52, %v169
  %v171 = vlaneseq
  %v172 = vshrl.u32 %v171, 7
  %v173 = vsub.s32 3, %v172
  %v174 = vrot.slane %v53, %v173
  %v175 = vlaneseq
  %v176 = vshrl.u32 %v175, 7
  %v177 = vsub.s32 3, %v176
  %v178 = vrot.slane %v54, %v177
  %v179 = vlaneseq
  %v180 = vshrl.u32 %v179, 7
  %v181 = vsub.s32 3, %v180
  %v182 = vrot.slane %v55, %v181
  %vm183 = vcmp.eq.s32.totalorder %v170, 1
  %vm184 = vcmp.eq.s32.totalorder %v174, 1
  %vm185 = vcmp.eq.s32.totalorder %v178, 1
  %vm186 = vcmp.eq.s32.totalorder %v182, 1
  %v187 = vsel %vm183, %v166, 0.0
  %v188 = vsel %vm184, %v165, 0.0
  %v189 = vsel %vm185, %v164, 0.0
  %v190 = vsel %vm186, %v163, 0.0
  %v191 = vlaneseq
  %v192 = vshrl.u32 %v191, 7
  %v193 = vsub.s32 4, %v192
  %v194 = vrot.slane %v52, %v193
  %v195 = vlaneseq
  %v196 = vshrl.u32 %v195, 7
  %v197 = vsub.s32 4, %v196
  %v198 = vrot.slane %v53, %v197
  %v199 = vlaneseq
  %v200 = vshrl.u32 %v199, 7
  %v201 = vsub.s32 4, %v200
  %v202 = vrot.slane %v54, %v201
  %v203 = vlaneseq
  %v204 = vshrl.u32 %v203, 7
  %v205 = vsub.s32 4, %v204
  %v206 = vrot.slane %v55, %v205
  %vm207 = vcmp.eq.s32.totalorder %v194, 1
  %vm208 = vcmp.eq.s32.totalorder %v198, 1
  %vm209 = vcmp.eq.s32.totalorder %v202, 1
  %vm210 = vcmp.eq.s32.totalorder %v206, 1
  %v211 = vsel %vm207, %v17, 0.0
  %v212 = vsel %vm208, %v29, 0.0
  %v213 = vsel %vm209, %v18, 0.0
  %v214 = vsel %vm210, %v30, 0.0
  %215 = vrot.lane.b32.xlu0 %v17, 127
  %v216 = vpop.permute.xlu0 %215
  %217 = vrot.lane.b32.xlu0 %v29, 127
  %v218 = vpop.permute.xlu0 %217
  %219 = vrot.lane.b32.xlu0 %v18, 127
  %v220 = vpop.permute.xlu0 %219
  %221 = vrot.lane.b32.xlu0 %v30, 127
  %v222 = vpop.permute.xlu0 %221
  %vm223 = vcmp.lt.s32.totalorder %v42, 127
  %v224 = vsel %vm223, %v220, %v222
  %v225 = vsel %vm223, %v218, %v220
  %v226 = vsel %vm223, %v216, %v218
  %v227 = vsel %vm223, %v222, %v216
  %v228 = vlaneseq
  %v229 = vshrl.u32 %v228, 7
  %v230 = vsub.s32 5, %v229
  %v231 = vrot.slane %v52, %v230
  %v232 = vlaneseq
  %v233 = vshrl.u32 %v232, 7
  %v234 = vsub.s32 5, %v233
  %v235 = vrot.slane %v53, %v234
  %v236 = vlaneseq
  %v237 = vshrl.u32 %v236, 7
  %v238 = vsub.s32 5, %v237
  %v239 = vrot.slane %v54, %v238
  %v240 = vlaneseq
  %v241 = vshrl.u32 %v240, 7
  %v242 = vsub.s32 5, %v241
  %v243 = vrot.slane %v55, %v242
  %vm244 = vcmp.eq.s32.totalorder %v231, 1
  %vm245 = vcmp.eq.s32.totalorder %v235, 1
  %vm246 = vcmp.eq.s32.totalorder %v239, 1
  %vm247 = vcmp.eq.s32.totalorder %v243, 1
  %v248 = vsel %vm244, %v226, 0.0
  %v249 = vsel %vm245, %v225, 0.0
  %v250 = vsel %vm246, %v224, 0.0
  %v251 = vsel %vm247, %v227, 0.0
  %252 = vrot.lane.b32.xlu0 %v17, 113
  %v253 = vpop.permute.xlu0 %252
  %254 = vrot.lane.b32.xlu0 %v29, 113
  %v255 = vpop.permute.xlu0 %254
  %256 = vrot.lane.b32.xlu0 %v18, 113
  %v257 = vpop.permute.xlu0 %256
  %258 = vrot.lane.b32.xlu0 %v30, 113
  %v259 = vpop.permute.xlu0 %258
  %vm260 = vcmp.lt.s32.totalorder %v42, 113
  %v261 = vsel %vm260, %v257, %v259
  %v262 = vsel %vm260, %v255, %v257
  %v263 = vsel %vm260, %v253, %v255
  %v264 = vsel %vm260, %v259, %v253
  %v265 = vlaneseq
  %v266 = vshrl.u32 %v265, 7
  %v267 = vsub.s32 6, %v266
  %v268 = vrot.slane %v52, %v267
  %v269 = vlaneseq
  %v270 = vshrl.u32 %v269, 7
  %v271 = vsub.s32 6, %v270
  %v272 = vrot.slane %v53, %v271
  %v273 = vlaneseq
  %v274 = vshrl.u32 %v273, 7
  %v275 = vsub.s32 6, %v274
  %v276 = vrot.slane %v54, %v275
  %v277 = vlaneseq
  %v278 = vshrl.u32 %v277, 7
  %v279 = vsub.s32 6, %v278
  %v280 = vrot.slane %v55, %v279
  %vm281 = vcmp.eq.s32.totalorder %v268, 1
  %vm282 = vcmp.eq.s32.totalorder %v272, 1
  %vm283 = vcmp.eq.s32.totalorder %v276, 1
  %vm284 = vcmp.eq.s32.totalorder %v280, 1
  %v285 = vsel %vm281, %v263, 0.0
  %v286 = vsel %vm282, %v262, 0.0
  %v287 = vsel %vm283, %v261, 0.0
  %v288 = vsel %vm284, %v264, 0.0
  %289 = vrot.lane.b32.xlu0 %v17, 112
  %v290 = vpop.permute.xlu0 %289
  %291 = vrot.lane.b32.xlu0 %v29, 112
  %v292 = vpop.permute.xlu0 %291
  %293 = vrot.lane.b32.xlu0 %v18, 112
  %v294 = vpop.permute.xlu0 %293
  %295 = vrot.lane.b32.xlu0 %v30, 112
  %v296 = vpop.permute.xlu0 %295
  %vm297 = vcmp.lt.s32.totalorder %v42, 112
  %v298 = vsel %vm297, %v294, %v296
  %v299 = vsel %vm297, %v292, %v294
  %v300 = vsel %vm297, %v290, %v292
  %v301 = vsel %vm297, %v296, %v290
  %v302 = vlaneseq
  %v303 = vshrl.u32 %v302, 7
  %v304 = vsub.s32 7, %v303
  %v305 = vrot.slane %v52, %v304
  %v306 = vlaneseq
  %v307 = vshrl.u32 %v306, 7
  %v308 = vsub.s32 7, %v307
  %v309 = vrot.slane %v53, %v308
  %v310 = vlaneseq
  %v311 = vshrl.u32 %v310, 7
  %v312 = vsub.s32 7, %v311
  %v313 = vrot.slane %v54, %v312
  %v314 = vlaneseq
  %v315 = vshrl.u32 %v314, 7
  %v316 = vsub.s32 7, %v315
  %v317 = vrot.slane %v55, %v316
  %vm318 = vcmp.eq.s32.totalorder %v305, 1
  %vm319 = vcmp.eq.s32.totalorder %v309, 1
  %vm320 = vcmp.eq.s32.totalorder %v313, 1
  %vm321 = vcmp.eq.s32.totalorder %v317, 1
  %v322 = vsel %vm318, %v300, 0.0
  %v323 = vsel %vm319, %v299, 0.0
  %v324 = vsel %vm320, %v298, 0.0
  %v325 = vsel %vm321, %v301, 0.0
  %326 = vrot.lane.b32.xlu0 %v17, 111
  %v327 = vpop.permute.xlu0 %326
  %328 = vrot.lane.b32.xlu0 %v29, 111
  %v329 = vpop.permute.xlu0 %328
  %330 = vrot.lane.b32.xlu0 %v18, 111
  %v331 = vpop.permute.xlu0 %330
  %332 = vrot.lane.b32.xlu0 %v30, 111
  %v333 = vpop.permute.xlu0 %332
  %vm334 = vcmp.lt.s32.totalorder %v42, 111
  %v335 = vsel %vm334, %v331, %v333
  %v336 = vsel %vm334, %v329, %v331
  %v337 = vsel %vm334, %v327, %v329
  %v338 = vsel %vm334, %v333, %v327
  %vm339 = vcmp.ne.f32.partialorder %v23, 0.0
  %vm340 = vcmp.ne.f32.partialorder %v24, 0.0
  %vm341 = vcmp.ne.f32.partialorder %v25, 0.0
  %vm342 = vcmp.ne.f32.partialorder %v26, 0.0
  %v343 = vsel %vm339, 1, 0
  %v344 = vsel %vm340, 1, 0
  %v345 = vsel %vm341, 1, 0
  %v346 = vsel %vm342, 1, 0
  %v347 = vlaneseq
  %v348 = vshrl.u32 %v347, 7
  %v349 = vsub.s32 0, %v348
  %v350 = vrot.slane %v343, %v349
  %v351 = vlaneseq
  %v352 = vshrl.u32 %v351, 7
  %v353 = vsub.s32 0, %v352
  %v354 = vrot.slane %v344, %v353
  %v355 = vlaneseq
  %v356 = vshrl.u32 %v355, 7
  %v357 = vsub.s32 0, %v356
  %v358 = vrot.slane %v345, %v357
  %v359 = vlaneseq
  %v360 = vshrl.u32 %v359, 7
  %v361 = vsub.s32 0, %v360
  %v362 = vrot.slane %v346, %v361
  %vm363 = vcmp.eq.s32.totalorder %v350, 1
  %vm364 = vcmp.eq.s32.totalorder %v354, 1
  %vm365 = vcmp.eq.s32.totalorder %v358, 1
  %vm366 = vcmp.eq.s32.totalorder %v362, 1
  %v367 = vsel %vm363, %v337, 0.0
  %v368 = vsel %vm364, %v336, 0.0
  %v369 = vsel %vm365, %v335, 0.0
  %v370 = vsel %vm366, %v338, 0.0
  %v375 = vrot.slane %v113, 4
  %v376 = vrot.slane %v114, 4
  %v377 = vrot.slane %v115, 4
  %v378 = vrot.slane %v116, 4
  %v387 = vrot.slane %v187, 4
  %v388 = vrot.slane %v188, 4
  %v389 = vrot.slane %v189, 4
  %v390 = vrot.slane %v190, 4
  %v399 = vrot.slane %v248, 4
  %v400 = vrot.slane %v249, 4
  %v401 = vrot.slane %v250, 4
  %v402 = vrot.slane %v251, 4
  %v411 = vrot.slane %v322, 4
  %v412 = vrot.slane %v323, 4
  %v413 = vrot.slane %v324, 4
  %v414 = vrot.slane %v325, 4
  %vm419 = vcmask 1043456
  %v420 = vsel %vm419, %v76, %v375
  %v421 = vsel %vm419, %v77, %v376
  %v422 = vsel %vm419, %v78, %v377
  %v423 = vsel %vm419, %v79, %v378
  %v424 = vsel %vm419, %v150, %v387
  %v425 = vsel %vm419, %v151, %v388
  %v426 = vsel %vm419, %v152, %v389
  %v427 = vsel %vm419, %v153, %v390
  %v428 = vsel %vm419, %v211, %v399
  %v429 = vsel %vm419, %v212, %v400
  %v430 = vsel %vm419, %v213, %v401
  %v431 = vsel %vm419, %v214, %v402
  %v432 = vsel %vm419, %v285, %v411
  %v433 = vsel %vm419, %v286, %v412
  %v434 = vsel %vm419, %v287, %v413
  %v435 = vsel %vm419, %v288, %v414
  %v436 = vsel %vm419, %v367, 1.0
  %v437 = vsel %vm419, %v368, 1.0
  %v438 = vsel %vm419, %v369, 1.0
  %v439 = vsel %vm419, %v370, 1.0
  %v440 = vld [vmem:[%s1] sm:$0xf]
  %vm441 = vcmask 302080
  %v443 = vsel %vm441, %v440, 0
  %vm445 = vcmask 1044480
  %v447 = vsel %vm445, %v436, 0
  %v450 = vsel %vm445, %v437, 0
  %v453 = vsel %vm445, %v438, 0
  %v456 = vsel %vm445, %v439, 0
  %458 = vmatprep.subr.mxu0 %v421
  %459 = vmatpush1.msra.mxu0 %v420
  %460 = vmatprep.subr.mxu0 %v425
  %461 = vmatpush1.msra.mxu0 %v424
  %462 = vmatprep.subr.mxu0 %v429
  %463 = vmatpush1.msra.mxu0 %v428
  %464 = vmatprep.subr.mxu0 %v433
  %465 = vmatpush1.msra.mxu0 %v432
  %466 = vmatprep.subr.mxu0 %v450
  %467 = vmatpush1.msra.mxu0 %v447
  %468 = vmatprep.subr.mxu0 0.0
  %469 = vmatpush1.msra.mxu0 0.0
  %470 = vmatprep.subr.mxu0 0.0
  %471 = vmatpush1.msra.mxu0 0.0
  %472 = vmatprep.subr.mxu0 0.0
  %473 = vmatpush1.msra.mxu0 0.0
  %474 = vmatprep.subr.mxu0 0.0
  %475 = vmatpush1.msra.mxu0 0.0
  %476 = vmatprep.subr.mxu0 0.0
  %477 = vmatpush1.msra.mxu0 0.0
  %478 = vmatprep.subr.mxu0 0.0
  %479 = vmatpush1.msra.mxu0 0.0
  %480 = vmatprep.subr.mxu0 0.0
  %481 = vmatpush1.msra.mxu0 0.0
  %482 = vmatprep.subr.mxu0 0.0
  %483 = vmatpush1.msra.mxu0 0.0
  %484 = vmatprep.subr.mxu0 0.0
  %485 = vmatpush1.msra.mxu0 0.0
  %486 = vmatprep.subr.mxu0 0.0
  %487 = vmatpush1.msra.mxu0 0.0
  %488 = vmatprep.subr.mxu0 0.0
  %489 = vmatpush1.msra.mxu0 0.0
  %490 = vmatprep.subr.mxu0 0.0
  %491 = vmatpush1.msra.mxu0 0.0
  %492 = vmatprep.subr.mxu0 0.0
  %493 = vmatpush1.msra.mxu0 0.0
  %494 = vmatprep.subr.mxu0 0.0
  %495 = vmatpush1.msra.mxu0 0.0
  %496 = vmatprep.subr.mxu0 0.0
  %497 = vmatpush1.msra.mxu0 0.0
  %498 = vmatprep.subr.mxu0 0.0
  %499 = vmatpush1.msra.mxu0 0.0
  %500 = vmatprep.subr.mxu0 0.0
  %501 = vmatpush1.msra.mxu0 0.0
  %502 = vmatprep.subr.mxu0 0.0
  %503 = vmatpush1.msra.mxu0 0.0
  %504 = vmatprep.subr.mxu0 0.0
  %505 = vmatpush1.msra.mxu0 0.0
  %506 = vmatprep.subr.mxu0 0.0
  %507 = vmatpush1.msra.mxu0 0.0
  %508 = vmatprep.subr.mxu0 0.0
  %509 = vmatpush1.msra.mxu0 0.0
  %510 = vmatprep.subr.mxu0 0.0
  %511 = vmatpush1.msra.mxu0 0.0
  %512 = vmatprep.subr.mxu0 0.0
  %513 = vmatpush1.msra.mxu0 0.0
  %514 = vmatprep.subr.mxu0 0.0
  %515 = vmatpush1.msra.mxu0 0.0
  %516 = vmatprep.subr.mxu0 0.0
  %517 = vmatpush1.msra.mxu0 0.0
  %518 = vmatprep.subr.mxu0 0.0
  %519 = vmatpush1.msra.mxu0 0.0
  %520 = vmatprep.subr.mxu0 0.0
  %521 = vmatpush1.msra.mxu0 0.0
  %522 = vmatprep.mubr.f32.mxu0 0.0
  %523 = vmatmul.mubr.f32.gmra.mrb[0].mxu0 %v443
  %v524 = vpop.f32.mrb[0].mxu0
  %v525 = vadd.f32 0.0, %v524
  %v526 = vpop.f32.mrb[0].mxu0
  %v527 = vadd.f32 0.0, %v526
  %528 = vdwg.mxu0
  %529 = vmatprep.subr.mxu0 %v423
  %530 = vmatpush1.msra.mxu0 %v422
  %531 = vmatprep.subr.mxu0 %v427
  %532 = vmatpush1.msra.mxu0 %v426
  %533 = vmatprep.subr.mxu0 %v431
  %534 = vmatpush1.msra.mxu0 %v430
  %535 = vmatprep.subr.mxu0 %v435
  %536 = vmatpush1.msra.mxu0 %v434
  %537 = vmatprep.subr.mxu0 %v456
  %538 = vmatpush1.msra.mxu0 %v453
  %539 = vmatprep.subr.mxu0 0.0
  %540 = vmatpush1.msra.mxu0 0.0
  %541 = vmatprep.subr.mxu0 0.0
  %542 = vmatpush1.msra.mxu0 0.0
  %543 = vmatprep.subr.mxu0 0.0
  %544 = vmatpush1.msra.mxu0 0.0
  %545 = vmatprep.subr.mxu0 0.0
  %546 = vmatpush1.msra.mxu0 0.0
  %547 = vmatprep.subr.mxu0 0.0
  %548 = vmatpush1.msra.mxu0 0.0
  %549 = vmatprep.subr.mxu0 0.0
  %550 = vmatpush1.msra.mxu0 0.0
  %551 = vmatprep.subr.mxu0 0.0
  %552 = vmatpush1.msra.mxu0 0.0
  %553 = vmatprep.subr.mxu0 0.0
  %554 = vmatpush1.msra.mxu0 0.0
  %555 = vmatprep.subr.mxu0 0.0
  %556 = vmatpush1.msra.mxu0 0.0
  %557 = vmatprep.subr.mxu0 0.0
  %558 = vmatpush1.msra.mxu0 0.0
  %559 = vmatprep.subr.mxu0 0.0
  %560 = vmatpush1.msra.mxu0 0.0
  %561 = vmatprep.subr.mxu0 0.0
  %562 = vmatpush1.msra.mxu0 0.0
  %563 = vmatprep.subr.mxu0 0.0
  %564 = vmatpush1.msra.mxu0 0.0
  %565 = vmatprep.subr.mxu0 0.0
  %566 = vmatpush1.msra.mxu0 0.0
  %567 = vmatprep.subr.mxu0 0.0
  %568 = vmatpush1.msra.mxu0 0.0
  %569 = vmatprep.subr.mxu0 0.0
  %570 = vmatpush1.msra.mxu0 0.0
  %571 = vmatprep.subr.mxu0 0.0
  %572 = vmatpush1.msra.mxu0 0.0
  %573 = vmatprep.subr.mxu0 0.0
  %574 = vmatpush1.msra.mxu0 0.0
  %575 = vmatprep.subr.mxu0 0.0
  %576 = vmatpush1.msra.mxu0 0.0
  %577 = vmatprep.subr.mxu0 0.0
  %578 = vmatpush1.msra.mxu0 0.0
  %579 = vmatprep.subr.mxu0 0.0
  %580 = vmatpush1.msra.mxu0 0.0
  %581 = vmatprep.subr.mxu0 0.0
  %582 = vmatpush1.msra.mxu0 0.0
  %583 = vmatprep.subr.mxu0 0.0
  %584 = vmatpush1.msra.mxu0 0.0
  %585 = vmatprep.subr.mxu0 0.0
  %586 = vmatpush1.msra.mxu0 0.0
  %587 = vmatprep.subr.mxu0 0.0
  %588 = vmatpush1.msra.mxu0 0.0
  %589 = vmatprep.subr.mxu0 0.0
  %590 = vmatpush1.msra.mxu0 0.0
  %591 = vmatprep.subr.mxu0 0.0
  %592 = vmatpush1.msra.mxu0 0.0
  %593 = vmatprep.mubr.f32.mxu0 0.0
  %594 = vmatmul.mubr.f32.gmra.mrb[0].mxu0 %v443
  %v595 = vpop.f32.mrb[0].mxu0
  %v596 = vadd.f32 0.0, %v595
  %v597 = vpop.f32.mrb[0].mxu0
  %v598 = vadd.f32 0.0, %v597
  %599 = vdwg.mxu0
  %v600 = vmax.f32 %v525, 0.0
  %v601 = vmax.f32 %v527, 0.0
  %v602 = vmax.f32 %v596, 0.0
  %v603 = vmax.f32 %v598, 0.0
  %604 = vrot.lane.b32.xlu0 %v600, 17
  %v605 = vpop.permute.xlu0 %604
  %606 = vrot.lane.b32.xlu0 %v601, 17
  %v607 = vpop.permute.xlu0 %606
  %608 = vrot.lane.b32.xlu0 %v602, 17
  %v609 = vpop.permute.xlu0 %608
  %610 = vrot.lane.b32.xlu0 %v603, 17
  %v611 = vpop.permute.xlu0 %610
  %v612 = vsel %vm43, %v609, %v611
  %v613 = vsel %vm43, %v607, %v609
  %v614 = vsel %vm43, %v605, %v607
  %v615 = vsel %vm43, %v611, %v605
  %v616 = vsel %vm72, %v615, 0.0
  %v617 = vsel %vm73, %v614, 0.0
  %v618 = vsel %vm74, %v613, 0.0
  %v619 = vsel %vm75, %v612, 0.0
  %620 = vrot.lane.b32.xlu0 %v600, 16
  %v621 = vpop.permute.xlu0 %620
  %622 = vrot.lane.b32.xlu0 %v601, 16
  %v623 = vpop.permute.xlu0 %622
  %624 = vrot.lane.b32.xlu0 %v602, 16
  %v625 = vpop.permute.xlu0 %624
  %626 = vrot.lane.b32.xlu0 %v603, 16
  %v627 = vpop.permute.xlu0 %626
  %v628 = vsel %vm88, %v625, %v627
  %v629 = vsel %vm88, %v623, %v625
  %v630 = vsel %vm88, %v621, %v623
  %v631 = vsel %vm88, %v627, %v621
  %v632 = vsel %vm109, %v631, 0.0
  %v633 = vsel %vm110, %v630, 0.0
  %v634 = vsel %vm111, %v629, 0.0
  %v635 = vsel %vm112, %v628, 0.0
  %636 = vrot.lane.b32.xlu0 %v600, 15
  %v637 = vpop.permute.xlu0 %636
  %638 = vrot.lane.b32.xlu0 %v601, 15
  %v639 = vpop.permute.xlu0 %638
  %640 = vrot.lane.b32.xlu0 %v602, 15
  %v641 = vpop.permute.xlu0 %640
  %642 = vrot.lane.b32.xlu0 %v603, 15
  %v643 = vpop.permute.xlu0 %642
  %v644 = vsel %vm125, %v641, %v643
  %v645 = vsel %vm125, %v639, %v641
  %v646 = vsel %vm125, %v637, %v639
  %v647 = vsel %vm125, %v643, %v637
  %v648 = vsel %vm146, %v647, 0.0
  %v649 = vsel %vm147, %v646, 0.0
  %v650 = vsel %vm148, %v645, 0.0
  %v651 = vsel %vm149, %v644, 0.0
  %652 = vrot.lane.b32.xlu0 %v600, 1
  %v653 = vpop.permute.xlu0 %652
  %654 = vrot.lane.b32.xlu0 %v601, 1
  %v655 = vpop.permute.xlu0 %654
  %656 = vrot.lane.b32.xlu0 %v602, 1
  %v657 = vpop.permute.xlu0 %656
  %658 = vrot.lane.b32.xlu0 %v603, 1
  %v659 = vpop.permute.xlu0 %658
  %v660 = vsel %vm162, %v657, %v659
  %v661 = vsel %vm162, %v655, %v657
  %v662 = vsel %vm162, %v653, %v655
  %v663 = vsel %vm162, %v659, %v653
  %v664 = vsel %vm183, %v663, 0.0
  %v665 = vsel %vm184, %v662, 0.0
  %v666 = vsel %vm185, %v661, 0.0
  %v667 = vsel %vm186, %v660, 0.0
  %v668 = vsel %vm207, %v600, 0.0
  %v669 = vsel %vm208, %v601, 0.0
  %v670 = vsel %vm209, %v602, 0.0
  %v671 = vsel %vm210, %v603, 0.0
  %672 = vrot.lane.b32.xlu0 %v600, 127
  %v673 = vpop.permute.xlu0 %672
  %674 = vrot.lane.b32.xlu0 %v601, 127
  %v675 = vpop.permute.xlu0 %674
  %676 = vrot.lane.b32.xlu0 %v602, 127
  %v677 = vpop.permute.xlu0 %676
  %678 = vrot.lane.b32.xlu0 %v603, 127
  %v679 = vpop.permute.xlu0 %678
  %v680 = vsel %vm223, %v677, %v679
  %v681 = vsel %vm223, %v675, %v677
  %v682 = vsel %vm223, %v673, %v675
  %v683 = vsel %vm223, %v679, %v673
  %v684 = vsel %vm244, %v682, 0.0
  %v685 = vsel %vm245, %v681, 0.0
  %v686 = vsel %vm246, %v680, 0.0
  %v687 = vsel %vm247, %v683, 0.0
  %688 = vrot.lane.b32.xlu0 %v600, 113
  %v689 = vpop.permute.xlu0 %688
  %690 = vrot.lane.b32.xlu0 %v601, 113
  %v691 = vpop.permute.xlu0 %690
  %692 = vrot.lane.b32.xlu0 %v602, 113
  %v693 = vpop.permute.xlu0 %692
  %694 = vrot.lane.b32.xlu0 %v603, 113
  %v695 = vpop.permute.xlu0 %694
  %v696 = vsel %vm260, %v693, %v695
  %v697 = vsel %vm260, %v691, %v693
  %v698 = vsel %vm260, %v689, %v691
  %v699 = vsel %vm260, %v695, %v689
  %v700 = vsel %vm281, %v698, 0.0
  %v701 = vsel %vm282, %v697, 0.0
  %v702 = vsel %vm283, %v696, 0.0
  %v703 = vsel %vm284, %v699, 0.0
  %704 = vrot.lane.b32.xlu0 %v600, 112
  %v705 = vpop.permute.xlu0 %704
  %706 = vrot.lane.b32.xlu0 %v601, 112
  %v707 = vpop.permute.xlu0 %706
  %708 = vrot.lane.b32.xlu0 %v602, 112
  %v709 = vpop.permute.xlu0 %708
  %710 = vrot.lane.b32.xlu0 %v603, 112
  %v711 = vpop.permute.xlu0 %710
  %v712 = vsel %vm297, %v709, %v711
  %v713 = vsel %vm297, %v707, %v709
  %v714 = vsel %vm297, %v705, %v707
  %v715 = vsel %vm297, %v711, %v705
  %v716 = vsel %vm318, %v714, 0.0
  %v717 = vsel %vm319, %v713, 0.0
  %v718 = vsel %vm320, %v712, 0.0
  %v719 = vsel %vm321, %v715, 0.0
  %720 = vrot.lane.b32.xlu0 %v600, 111
  %v721 = vpop.permute.xlu0 %720
  %722 = vrot.lane.b32.xlu0 %v601, 111
  %v723 = vpop.permute.xlu0 %722
  %724 = vrot.lane.b32.xlu0 %v602, 111
  %v725 = vpop.permute.xlu0 %724
  %726 = vrot.lane.b32.xlu0 %v603, 111
  %v727 = vpop.permute.xlu0 %726
  %v728 = vsel %vm334, %v725, %v727
  %v729 = vsel %vm334, %v723, %v725
  %v730 = vsel %vm334, %v721, %v723
  %v731 = vsel %vm334, %v727, %v721
  %v732 = vsel %vm363, %v730, 0.0
  %v733 = vsel %vm364, %v729, 0.0
  %v734 = vsel %vm365, %v728, 0.0
  %v735 = vsel %vm366, %v731, 0.0
  %v740 = vrot.slane %v632, 4
  %v741 = vrot.slane %v633, 4
  %v742 = vrot.slane %v634, 4
  %v743 = vrot.slane %v635, 4
  %v752 = vrot.slane %v664, 4
  %v753 = vrot.slane %v665, 4
  %v754 = vrot.slane %v666, 4
  %v755 = vrot.slane %v667, 4
  %v764 = vrot.slane %v684, 4
  %v765 = vrot.slane %v685, 4
  %v766 = vrot.slane %v686, 4
  %v767 = vrot.slane %v687, 4
  %v776 = vrot.slane %v716, 4
  %v777 = vrot.slane %v717, 4
  %v778 = vrot.slane %v718, 4
  %v779 = vrot.slane %v719, 4
  %v784 = vsel %vm419, %v616, %v740
  %v785 = vsel %vm419, %v617, %v741
  %v786 = vsel %vm419, %v618, %v742
  %v787 = vsel %vm419, %v619, %v743
  %v788 = vsel %vm419, %v648, %v752
  %v789 = vsel %vm419, %v649, %v753
  %v790 = vsel %vm419, %v650, %v754
  %v791 = vsel %vm419, %v651, %v755
  %v792 = vsel %vm419, %v668, %v764
  %v793 = vsel %vm419, %v669, %v765
  %v794 = vsel %vm419, %v670, %v766
  %v795 = vsel %vm419, %v671, %v767
  %v796 = vsel %vm419, %v700, %v776
  %v797 = vsel %vm419, %v701, %v777
  %v798 = vsel %vm419, %v702, %v778
  %v799 = vsel %vm419, %v703, %v779
  %v800 = vsel %vm419, %v732, 1.0
  %v801 = vsel %vm419, %v733, 1.0
  %v802 = vsel %vm419, %v734, 1.0
  %v803 = vsel %vm419, %v735, 1.0
  %v804 = vld [vmem:[%s2] sm:$0xf]
  %v806 = vsel %vm441, %v804, 0
  %v809 = vsel %vm445, %v800, 0
  %v812 = vsel %vm445, %v801, 0
  %v815 = vsel %vm445, %v802, 0
  %v818 = vsel %vm445, %v803, 0
  %820 = vmatprep.subr.mxu0 %v785
  %821 = vmatpush1.msra.mxu0 %v784
  %822 = vmatprep.subr.mxu0 %v789
  %823 = vmatpush1.msra.mxu0 %v788
  %824 = vmatprep.subr.mxu0 %v793
  %825 = vmatpush1.msra.mxu0 %v792
  %826 = vmatprep.subr.mxu0 %v797
  %827 = vmatpush1.msra.mxu0 %v796
  %828 = vmatprep.subr.mxu0 %v812
  %829 = vmatpush1.msra.mxu0 %v809
  %830 = vmatprep.subr.mxu0 0.0
  %831 = vmatpush1.msra.mxu0 0.0
  %832 = vmatprep.subr.mxu0 0.0
  %833 = vmatpush1.msra.mxu0 0.0
  %834 = vmatprep.subr.mxu0 0.0
  %835 = vmatpush1.msra.mxu0 0.0
  %836 = vmatprep.subr.mxu0 0.0
  %837 = vmatpush1.msra.mxu0 0.0
  %838 = vmatprep.subr.mxu0 0.0
  %839 = vmatpush1.msra.mxu0 0.0
  %840 = vmatprep.subr.mxu0 0.0
  %841 = vmatpush1.msra.mxu0 0.0
  %842 = vmatprep.subr.mxu0 0.0
  %843 = vmatpush1.msra.mxu0 0.0
  %844 = vmatprep.subr.mxu0 0.0
  %845 = vmatpush1.msra.mxu0 0.0
  %846 = vmatprep.subr.mxu0 0.0
  %847 = vmatpush1.msra.mxu0 0.0
  %848 = vmatprep.subr.mxu0 0.0
  %849 = vmatpush1.msra.mxu0 0.0
  %850 = vmatprep.subr.mxu0 0.0
  %851 = vmatpush1.msra.mxu0 0.0
  %852 = vmatprep.subr.mxu0 0.0
  %853 = vmatpush1.msra.mxu0 0.0
  %854 = vmatprep.subr.mxu0 0.0
  %855 = vmatpush1.msra.mxu0 0.0
  %856 = vmatprep.subr.mxu0 0.0
  %857 = vmatpush1.msra.mxu0 0.0
  %858 = vmatprep.subr.mxu0 0.0
  %859 = vmatpush1.msra.mxu0 0.0
  %860 = vmatprep.subr.mxu0 0.0
  %861 = vmatpush1.msra.mxu0 0.0
  %862 = vmatprep.subr.mxu0 0.0
  %863 = vmatpush1.msra.mxu0 0.0
  %864 = vmatprep.subr.mxu0 0.0
  %865 = vmatpush1.msra.mxu0 0.0
  %866 = vmatprep.subr.mxu0 0.0
  %867 = vmatpush1.msra.mxu0 0.0
  %868 = vmatprep.subr.mxu0 0.0
  %869 = vmatpush1.msra.mxu0 0.0
  %870 = vmatprep.subr.mxu0 0.0
  %871 = vmatpush1.msra.mxu0 0.0
  %872 = vmatprep.subr.mxu0 0.0
  %873 = vmatpush1.msra.mxu0 0.0
  %874 = vmatprep.subr.mxu0 0.0
  %875 = vmatpush1.msra.mxu0 0.0
  %876 = vmatprep.subr.mxu0 0.0
  %877 = vmatpush1.msra.mxu0 0.0
  %878 = vmatprep.subr.mxu0 0.0
  %879 = vmatpush1.msra.mxu0 0.0
  %880 = vmatprep.subr.mxu0 0.0
  %881 = vmatpush1.msra.mxu0 0.0
  %882 = vmatprep.subr.mxu0 0.0
  %883 = vmatpush1.msra.mxu0 0.0
  %884 = vmatprep.mubr.f32.mxu0 0.0
  %885 = vmatmul.mubr.f32.gmra.mrb[0].mxu0 %v806
  %v886 = vpop.f32.mrb[0].mxu0
  %v887 = vadd.f32 0.0, %v886
  %v888 = vpop.f32.mrb[0].mxu0
  %v889 = vadd.f32 0.0, %v888
  %890 = vdwg.mxu0
  %891 = vmatprep.subr.mxu0 %v787
  %892 = vmatpush1.msra.mxu0 %v786
  %893 = vmatprep.subr.mxu0 %v791
  %894 = vmatpush1.msra.mxu0 %v790
  %895 = vmatprep.subr.mxu0 %v795
  %896 = vmatpush1.msra.mxu0 %v794
  %897 = vmatprep.subr.mxu0 %v799
  %898 = vmatpush1.msra.mxu0 %v798
  %899 = vmatprep.subr.mxu0 %v818
  %900 = vmatpush1.msra.mxu0 %v815
  %901 = vmatprep.subr.mxu0 0.0
  %902 = vmatpush1.msra.mxu0 0.0
  %903 = vmatprep.subr.mxu0 0.0
  %904 = vmatpush1.msra.mxu0 0.0
  %905 = vmatprep.subr.mxu0 0.0
  %906 = vmatpush1.msra.mxu0 0.0
  %907 = vmatprep.subr.mxu0 0.0
  %908 = vmatpush1.msra.mxu0 0.0
  %909 = vmatprep.subr.mxu0 0.0
  %910 = vmatpush1.msra.mxu0 0.0
  %911 = vmatprep.subr.mxu0 0.0
  %912 = vmatpush1.msra.mxu0 0.0
  %913 = vmatprep.subr.mxu0 0.0
  %914 = vmatpush1.msra.mxu0 0.0
  %915 = vmatprep.subr.mxu0 0.0
  %916 = vmatpush1.msra.mxu0 0.0
  %917 = vmatprep.subr.mxu0 0.0
  %918 = vmatpush1.msra.mxu0 0.0
  %919 = vmatprep.subr.mxu0 0.0
  %920 = vmatpush1.msra.mxu0 0.0
  %921 = vmatprep.subr.mxu0 0.0
  %922 = vmatpush1.msra.mxu0 0.0
  %923 = vmatprep.subr.mxu0 0.0
  %924 = vmatpush1.msra.mxu0 0.0
  %925 = vmatprep.subr.mxu0 0.0
  %926 = vmatpush1.msra.mxu0 0.0
  %927 = vmatprep.subr.mxu0 0.0
  %928 = vmatpush1.msra.mxu0 0.0
  %929 = vmatprep.subr.mxu0 0.0
  %930 = vmatpush1.msra.mxu0 0.0
  %931 = vmatprep.subr.mxu0 0.0
  %932 = vmatpush1.msra.mxu0 0.0
  %933 = vmatprep.subr.mxu0 0.0
  %934 = vmatpush1.msra.mxu0 0.0
  %935 = vmatprep.subr.mxu0 0.0
  %936 = vmatpush1.msra.mxu0 0.0
  %937 = vmatprep.subr.mxu0 0.0
  %938 = vmatpush1.msra.mxu0 0.0
  %939 = vmatprep.subr.mxu0 0.0
  %940 = vmatpush1.msra.mxu0 0.0
  %941 = vmatprep.subr.mxu0 0.0
  %942 = vmatpush1.msra.mxu0 0.0
  %943 = vmatprep.subr.mxu0 0.0
  %944 = vmatpush1.msra.mxu0 0.0
  %945 = vmatprep.subr.mxu0 0.0
  %946 = vmatpush1.msra.mxu0 0.0
  %947 = vmatprep.subr.mxu0 0.0
  %948 = vmatpush1.msra.mxu0 0.0
  %949 = vmatprep.subr.mxu0 0.0
  %950 = vmatpush1.msra.mxu0 0.0
  %951 = vmatprep.subr.mxu0 0.0
  %952 = vmatpush1.msra.mxu0 0.0
  %953 = vmatprep.subr.mxu0 0.0
  %954 = vmatpush1.msra.mxu0 0.0
  %955 = vmatprep.mubr.f32.mxu0 0.0
  %956 = vmatmul.mubr.f32.gmra.mrb[0].mxu0 %v806
  %v957 = vpop.f32.mrb[0].mxu0
  %v958 = vadd.f32 0.0, %v957
  %v959 = vpop.f32.mrb[0].mxu0
  %v960 = vadd.f32 0.0, %v959
  %961 = vdwg.mxu0
  %v962 = vxor.u32 %v887, 2147483648
  %v963 = vxor.u32 %v889, 2147483648
  %v964 = vxor.u32 %v958, 2147483648
  %v965 = vxor.u32 %v960, 2147483648
  %v966 = vmul.f32 %v962, 1.442695
  %v967 = vpow.pop %v966
  %v968 = vmul.f32 %v963, 1.442695
  %v969 = vpow.pop %v968
  %v970 = vmul.f32 %v964, 1.442695
  %v971 = vpow.pop %v970
  %v972 = vmul.f32 %v965, 1.442695
  %v973 = vpow.pop %v972
  %v974 = vadd.f32 %v967, 1.0
  %v975 = vadd.f32 %v969, 1.0
  %v976 = vadd.f32 %v971, 1.0
  %v977 = vadd.f32 %v973, 1.0
  %v978 = vrcp.pop %v974
  %v979 = vmul.f32 1.0, %v978
  %v980 = vrcp.pop %v975
  %v981 = vmul.f32 1.0, %v980
  %v982 = vrcp.pop %v976
  %v983 = vmul.f32 1.0, %v982
  %v984 = vrcp.pop %v977
  %v985 = vmul.f32 1.0, %v984
  %v990 = vcombine.low %v979, %v981
  %v991 = vcombine.low %v983, %v985
  %994 = vst [vmem:[%s4] sm:$0xff] %v990
  %995 = vst [vmem:[%s4 + $0x8] sm:$0xff] %v991
  // Predicated region
  $region18: #{endblock_pallas.1} parent=0 // pred_check
    _
  $region19: #{endblock_pallas.1} parent=0 // pred_check_branch
    %997 = sbr.rel (0) target = $region21
  $region20: #{endblock_pallas.1} parent=0 // pred_region
    _
  $region21: #{endblock_pallas.1} parent=0 // pred_fallthru
    _
  // Predicated region
  $region22: #{endblock_pallas.1} parent=0 // pred_check
    _
  $region23: #{endblock_pallas.1} parent=0 // pred_check_branch
    %999 = sbr.rel (0) target = $region25
  $region24: #{endblock_pallas.1} parent=0 // pred_region
    _
  $region25: #{endblock_pallas.1} parent=0 // pred_fallthru
    _

</llo_original>
